<compile_context>
chip_gen: v6e
topology: v6e:2x2x1
jax: 0.10.0
libtpu: 0.0.40
codegen_flags: <defaults>
</compile_context>

<pallas_src>
import math
import functools
import numpy as np
import jax
import jax.numpy as jnp
from jax import lax
from jax.experimental import pallas as pl
from jax.experimental.pallas import tpu as pltpu

SQRT_HALF = float(np.sqrt(0.5))
BN_EPS = 1e-5
LANE = 128


def _round_up(x, m):
    return (x + m - 1) // m * m


def _fused_ft_kernel(x_ref, *refs, n_glu, vbs_per_block, vb):
    """Full FeatureTransformer for one block of `vbs_per_block` virtual batches.

    refs = (w0, gb0, w1, gb1, ..., out). All weight / gamma-beta blocks are
    grid-constant VMEM blocks; the layer loop is unrolled at trace time.
    """
    o_ref = refs[-1]
    layer_refs = refs[:-1]

    h = x_ref[...].astype(jnp.float32)
    for l in range(n_glu):
        w_ref, gb_ref = layer_refs[2 * l:2 * l + 2]

        # Single fused matmul over both halves: [rows, d_in_l] @ [d_in_l, 2*d_out_p].
        y = jnp.dot(h, w_ref[...], preferred_element_type=jnp.float32)
        rows, cols = y.shape

        gamma = gb_ref[0, :]
        beta = gb_ref[1, :]

        # Ghost BN: per-virtual-batch stats, one-pass mean / mean-of-squares.
        if vbs_per_block == 1:
            mu = jnp.mean(y, axis=0, keepdims=True)
            msq = jnp.mean(y * y, axis=0, keepdims=True)
            var = jnp.maximum(msq - mu * mu, 0.0)
            scale = gamma.reshape(1, cols) * lax.rsqrt(var + BN_EPS)
            shift = beta.reshape(1, cols) - mu * scale
            yn = y * scale + shift
        else:
            yv = y.reshape(vbs_per_block, vb, cols)
            mu = jnp.mean(yv, axis=1, keepdims=True)
            msq = jnp.mean(yv * yv, axis=1, keepdims=True)
            var = jnp.maximum(msq - mu * mu, 0.0)
            scale = gamma.reshape(1, 1, cols) * lax.rsqrt(var + BN_EPS)
            shift = beta.reshape(1, 1, cols) - mu * scale
            yn = (yv * scale + shift).reshape(rows, cols)

        # GLU gate; split at cols//2 == d_out_p, a multiple of 128 (lane-aligned).
        d = cols // 2
        out = yn[:, :d] * jax.nn.sigmoid(yn[:, d:])

        # Residual chain of the FeatureTransformer.
        h = out if l == 0 else (h + out) * SQRT_HALF

    o_ref[...] = h.astype(o_ref.dtype)


def _pack_padded_params(params, output_dim, d_out_p):
    """Pad per-layer params so the per-half output dim is lane-aligned (x128).

    Weight rows of layers > 0 are padded to d_out_p (the in-kernel activations
    carry the padded dim); padded rows/cols are zero, padded gamma is 1 and
    padded beta is 0 so padded lanes stay exactly 0.  gamma/beta are packed
    into one (2, 2*d_out_p) block per layer.
    """
    packed = []
    col_pad = d_out_p - output_dim
    for li, (w, gamma, beta) in enumerate(params):
        d_in_l = w.shape[0]
        row_pad = 0 if li == 0 else d_out_p - d_in_l
        wv = jnp.pad(w[:, :output_dim], ((0, row_pad), (0, col_pad)))
        wg = jnp.pad(w[:, output_dim:], ((0, row_pad), (0, col_pad)))
        w_p = jnp.concatenate([wv, wg], axis=1)

        gv = jnp.pad(gamma[:output_dim], (0, col_pad), constant_values=1.0)
        gg = jnp.pad(gamma[output_dim:], (0, col_pad), constant_values=1.0)
        bv = jnp.pad(beta[:output_dim], (0, col_pad))
        bg = jnp.pad(beta[output_dim:], (0, col_pad))
        g_p = jnp.concatenate([gv, gg]).reshape(1, 2 * d_out_p)
        b_p = jnp.concatenate([bv, bg]).reshape(1, 2 * d_out_p)
        gb_p = jnp.concatenate([g_p, b_p], axis=0)          # (2, 2*d_out_p)
        packed.append((w_p, gb_p))
    return packed


def feature_transformer(x, params, virtual_batch_size=128, max_rows_per_block=1024):
    """Fused FeatureTransformer forward: one pallas_call over row blocks."""
    B, d_in = x.shape
    n_glu = len(params)
    output_dim = params[0][0].shape[1] // 2
    d_out_p = _round_up(output_dim, LANE)

    # torch.chunk(ceil(B/vbs), 0) -> chunks of size ceil(B/n); require equal chunks.
    n_chunks = int(math.ceil(B / virtual_batch_size))
    vb = int(math.ceil(B / n_chunks))
    assert B % vb == 0, "batch must split into equal virtual batches for this kernel"
    n_chunks = B // vb

    # Pack several virtual batches per grid step (largest divisor that fits).
    vbs_per_block = 1
    for k in range(n_chunks, 0, -1):
        if n_chunks % k == 0 and k * vb <= max_rows_per_block:
            vbs_per_block = k
            break
    rows_block = vbs_per_block * vb
    n_blocks = n_chunks // vbs_per_block

    packed = _pack_padded_params(params, output_dim, d_out_p)

    in_specs = [pl.BlockSpec((rows_block, d_in), lambda i: (i, 0))]
    args = [x]
    for (w_p, gb_p) in packed:
        # Constant index_maps -> fetched once, VMEM-resident across the grid.
        in_specs.append(pl.BlockSpec(w_p.shape, lambda i: (0, 0)))
        in_specs.append(pl.BlockSpec(gb_p.shape, lambda i: (0, 0)))
        args.extend([w_p, gb_p])

    kernel = functools.partial(_fused_ft_kernel, n_glu=n_glu,
                               vbs_per_block=vbs_per_block, vb=vb)
    out_p = pl.pallas_call(
        kernel,
        out_shape=jax.ShapeDtypeStruct((B, d_out_p), x.dtype),
        grid=(n_blocks,),
        in_specs=in_specs,
        out_specs=pl.BlockSpec((rows_block, d_out_p), lambda i: (i, 0)),
        compiler_params=pltpu.CompilerParams(dimension_semantics=("parallel",)),
    )(*args)
    if d_out_p == output_dim:
        return out_p
    return out_p[:, :output_dim]


def init_feature_transformer(key, input_dim, output_dim, n_glu=2):
    """Deterministic synthetic params matching the PyTorch module's shapes."""
    params = []
    d_in = input_dim
    for _ in range(n_glu):
        key, wk = jax.random.split(key)
        bound = 1.0 / math.sqrt(d_in)  # nn.Linear default init range
        w = jax.random.uniform(wk, (d_in, 2 * output_dim), jnp.float32, -bound, bound)
        gamma = jnp.ones((2 * output_dim,), jnp.float32)   # BatchNorm1d init
        beta = jnp.zeros((2 * output_dim,), jnp.float32)
        params.append((w, gamma, beta))
        d_in = output_dim
    return params


def feature_transformer_reference(x, params, virtual_batch_size=128):
    """Pure-JAX reference of the PyTorch forward (training-mode BN, two-pass)."""
    def glu_ref(x, p):
        w, gamma, beta = p
        y = x @ w
        B = x.shape[0]
        n_chunks = int(math.ceil(B / virtual_batch_size))
        vb = int(math.ceil(B / n_chunks))
        chunks = []
        for s in range(0, B, vb):
            yc = y[s:s + vb]
            mu = yc.mean(0, keepdims=True)
            var = ((yc - mu) ** 2).mean(0, keepdims=True)
            chunks.append((yc - mu) / jnp.sqrt(var + BN_EPS))
        y = jnp.concatenate(chunks, 0) * gamma + beta
        d = w.shape[1] // 2
        return y[:, :d] * jax.nn.sigmoid(y[:, d:])

    out = glu_ref(x, params[0])
    for p in params[1:]:
        out = (out + glu_ref(out, p)) * SQRT_HALF
    return out


if __name__ == "__main__":
    B, input_dim, output_dim = 16, 32, 32
    n_glu = 2
    virtual_batch_size = 8  # -> 2 virtual batches of 8 rows each

    key = jax.random.PRNGKey(0)
    key, xk = jax.random.split(key)
    x = jax.random.normal(xk, (B, input_dim), jnp.float32)

    params = init_feature_transformer(key, input_dim, output_dim, n_glu=n_glu)

    out = feature_transformer(x, params, virtual_batch_size=virtual_batch_size)
    out = jax.block_until_ready(out)

    ref = feature_transformer_reference(x, params, virtual_batch_size=virtual_batch_size)
    np.testing.assert_allclose(np.asarray(out), np.asarray(ref), rtol=1e-4, atol=1e-5)

    print("KERNEL_OK")
</pallas_src>

<mosaic_0001>
module attributes {stable_mosaic.version = 11 : i64} {
  func.func @_fused_ft_kernel(%arg0: i32, %arg1: memref<16x32xf32, #tpu.memory_space<vmem>>, %arg2: memref<32x256xf32, #tpu.memory_space<vmem>>, %arg3: memref<2x256xf32, #tpu.memory_space<vmem>>, %arg4: memref<128x256xf32, #tpu.memory_space<vmem>>, %arg5: memref<2x256xf32, #tpu.memory_space<vmem>>, %arg6: memref<16x128xf32, #tpu.memory_space<vmem>>) attributes {dimension_semantics = [#tpu.dimension_semantics<parallel>], iteration_bounds = array<i64: 1>, scalar_prefetch = 0 : i64, scratch_operands = 0 : i64, tpu.core_type = #tpu.core_type<tc>, window_params = [{transform_indices = @transform_0, window_bounds = array<i64: 16, 32>}, {pipeline_mode = #tpu.pipeline_mode<synchronous>, transform_indices = @transform_1, window_bounds = array<i64: 32, 256>}, {pipeline_mode = #tpu.pipeline_mode<synchronous>, transform_indices = @transform_2, window_bounds = array<i64: 2, 256>}, {pipeline_mode = #tpu.pipeline_mode<synchronous>, transform_indices = @transform_3, window_bounds = array<i64: 128, 256>}, {pipeline_mode = #tpu.pipeline_mode<synchronous>, transform_indices = @transform_4, window_bounds = array<i64: 2, 256>}, {transform_indices = @transform_5, window_bounds = array<i64: 16, 128>}]} {
    %c0 = arith.constant 0 : index
    %c0_0 = arith.constant 0 : index
    %0 = vector.load %arg1[%c0, %c0_0] : memref<16x32xf32, #tpu.memory_space<vmem>>, vector<16x32xf32>
    %c0_1 = arith.constant 0 : index
    %c0_2 = arith.constant 0 : index
    %1 = vector.load %arg2[%c0_1, %c0_2] : memref<32x256xf32, #tpu.memory_space<vmem>>, vector<32x256xf32>
    %cst = arith.constant dense<0.000000e+00> : vector<16x256xf32>
    %2 = tpu.matmul %0, %1, %cst {dimension_numbers = #tpu.dot_dimension_numbers<[1], [0], [0], [1], [0, 0, 1, 1], [], []>} : vector<16x32xf32>, vector<32x256xf32>, vector<16x256xf32> -> vector<16x256xf32>
    %c0_3 = arith.constant 0 : index
    %c0_4 = arith.constant 0 : index
    %3 = vector.load %arg3[%c0_3, %c0_4] : memref<2x256xf32, #tpu.memory_space<vmem>>, vector<1x256xf32>
    %4 = vector.shape_cast %3 : vector<1x256xf32> to vector<256xf32>
    %c1 = arith.constant 1 : index
    %c0_5 = arith.constant 0 : index
    %5 = vector.load %arg3[%c1, %c0_5] : memref<2x256xf32, #tpu.memory_space<vmem>>, vector<1x256xf32>
    %6 = vector.shape_cast %5 : vector<1x256xf32> to vector<256xf32>
    %7 = vector.shape_cast %2 : vector<16x256xf32> to vector<2x8x256xf32>
    %cst_6 = arith.constant dense<0.000000e+00> : vector<2x256xf32>
    %8 = vector.multi_reduction <add>, %7, %cst_6 [1] : vector<2x8x256xf32> to vector<2x256xf32>
    %9 = vector.shape_cast %8 : vector<2x256xf32> to vector<2x1x256xf32>
    %cst_7 = arith.constant 8.000000e+00 : f32
    %10 = vector.broadcast %cst_7 : f32 to vector<2x1x256xf32>
    %11 = arith.divf %9, %10 : vector<2x1x256xf32>
    %12 = arith.mulf %7, %7 : vector<2x8x256xf32>
    %cst_8 = arith.constant dense<0.000000e+00> : vector<2x256xf32>
    %13 = vector.multi_reduction <add>, %12, %cst_8 [1] : vector<2x8x256xf32> to vector<2x256xf32>
    %14 = vector.shape_cast %13 : vector<2x256xf32> to vector<2x1x256xf32>
    %cst_9 = arith.constant 8.000000e+00 : f32
    %15 = vector.broadcast %cst_9 : f32 to vector<2x1x256xf32>
    %16 = arith.divf %14, %15 : vector<2x1x256xf32>
    %17 = arith.mulf %11, %11 : vector<2x1x256xf32>
    %18 = arith.subf %16, %17 : vector<2x1x256xf32>
    %cst_10 = arith.constant 0.000000e+00 : f32
    %19 = vector.broadcast %cst_10 : f32 to vector<2x1x256xf32>
    %20 = arith.maximumf %18, %19 : vector<2x1x256xf32>
    %21 = vector.shape_cast %4 : vector<256xf32> to vector<1x1x256xf32>
    %cst_11 = arith.constant 9.99999974E-6 : f32
    %22 = vector.broadcast %cst_11 : f32 to vector<2x1x256xf32>
    %23 = arith.addf %20, %22 : vector<2x1x256xf32>
    %24 = math.rsqrt %23 : vector<2x1x256xf32>
    %25 = vector.broadcast %21 : vector<1x1x256xf32> to vector<2x1x256xf32>
    %26 = arith.mulf %25, %24 : vector<2x1x256xf32>
    %27 = vector.shape_cast %6 : vector<256xf32> to vector<1x1x256xf32>
    %28 = arith.mulf %11, %26 : vector<2x1x256xf32>
    %29 = vector.broadcast %27 : vector<1x1x256xf32> to vector<2x1x256xf32>
    %30 = arith.subf %29, %28 : vector<2x1x256xf32>
    %31 = vector.broadcast %26 : vector<2x1x256xf32> to vector<2x8x256xf32>
    %32 = arith.mulf %7, %31 : vector<2x8x256xf32>
    %33 = vector.broadcast %30 : vector<2x1x256xf32> to vector<2x8x256xf32>
    %34 = arith.addf %32, %33 : vector<2x8x256xf32>
    %35 = vector.shape_cast %34 : vector<2x8x256xf32> to vector<16x256xf32>
    %36 = vector.extract_strided_slice %35 {offsets = [0, 0], sizes = [16, 128], strides = [1, 1]} : vector<16x256xf32> to vector<16x128xf32>
    %37 = vector.extract_strided_slice %35 {offsets = [0, 128], sizes = [16, 128], strides = [1, 1]} : vector<16x256xf32> to vector<16x128xf32>
    %38 = arith.negf %37 : vector<16x128xf32>
    %39 = math.exp %38 : vector<16x128xf32>
    %cst_12 = arith.constant 1.000000e+00 : f32
    %40 = vector.broadcast %cst_12 : f32 to vector<16x128xf32>
    %41 = arith.addf %40, %39 : vector<16x128xf32>
    %42 = arith.divf %40, %41 : vector<16x128xf32>
    %43 = arith.mulf %36, %42 : vector<16x128xf32>
    %c0_13 = arith.constant 0 : index
    %c0_14 = arith.constant 0 : index
    %44 = vector.load %arg4[%c0_13, %c0_14] : memref<128x256xf32, #tpu.memory_space<vmem>>, vector<128x256xf32>
    %cst_15 = arith.constant dense<0.000000e+00> : vector<16x256xf32>
    %45 = tpu.matmul %43, %44, %cst_15 {dimension_numbers = #tpu.dot_dimension_numbers<[1], [0], [0], [1], [0, 0, 1, 1], [], []>} : vector<16x128xf32>, vector<128x256xf32>, vector<16x256xf32> -> vector<16x256xf32>
    %c0_16 = arith.constant 0 : index
    %c0_17 = arith.constant 0 : index
    %46 = vector.load %arg5[%c0_16, %c0_17] : memref<2x256xf32, #tpu.memory_space<vmem>>, vector<1x256xf32>
    %47 = vector.shape_cast %46 : vector<1x256xf32> to vector<256xf32>
    %c1_18 = arith.constant 1 : index
    %c0_19 = arith.constant 0 : index
    %48 = vector.load %arg5[%c1_18, %c0_19] : memref<2x256xf32, #tpu.memory_space<vmem>>, vector<1x256xf32>
    %49 = vector.shape_cast %48 : vector<1x256xf32> to vector<256xf32>
    %50 = vector.shape_cast %45 : vector<16x256xf32> to vector<2x8x256xf32>
    %cst_20 = arith.constant dense<0.000000e+00> : vector<2x256xf32>
    %51 = vector.multi_reduction <add>, %50, %cst_20 [1] : vector<2x8x256xf32> to vector<2x256xf32>
    %52 = vector.shape_cast %51 : vector<2x256xf32> to vector<2x1x256xf32>
    %cst_21 = arith.constant 8.000000e+00 : f32
    %53 = vector.broadcast %cst_21 : f32 to vector<2x1x256xf32>
    %54 = arith.divf %52, %53 : vector<2x1x256xf32>
    %55 = arith.mulf %50, %50 : vector<2x8x256xf32>
    %cst_22 = arith.constant dense<0.000000e+00> : vector<2x256xf32>
    %56 = vector.multi_reduction <add>, %55, %cst_22 [1] : vector<2x8x256xf32> to vector<2x256xf32>
    %57 = vector.shape_cast %56 : vector<2x256xf32> to vector<2x1x256xf32>
    %cst_23 = arith.constant 8.000000e+00 : f32
    %58 = vector.broadcast %cst_23 : f32 to vector<2x1x256xf32>
    %59 = arith.divf %57, %58 : vector<2x1x256xf32>
    %60 = arith.mulf %54, %54 : vector<2x1x256xf32>
    %61 = arith.subf %59, %60 : vector<2x1x256xf32>
    %cst_24 = arith.constant 0.000000e+00 : f32
    %62 = vector.broadcast %cst_24 : f32 to vector<2x1x256xf32>
    %63 = arith.maximumf %61, %62 : vector<2x1x256xf32>
    %64 = vector.shape_cast %47 : vector<256xf32> to vector<1x1x256xf32>
    %cst_25 = arith.constant 9.99999974E-6 : f32
    %65 = vector.broadcast %cst_25 : f32 to vector<2x1x256xf32>
    %66 = arith.addf %63, %65 : vector<2x1x256xf32>
    %67 = math.rsqrt %66 : vector<2x1x256xf32>
    %68 = vector.broadcast %64 : vector<1x1x256xf32> to vector<2x1x256xf32>
    %69 = arith.mulf %68, %67 : vector<2x1x256xf32>
    %70 = vector.shape_cast %49 : vector<256xf32> to vector<1x1x256xf32>
    %71 = arith.mulf %54, %69 : vector<2x1x256xf32>
    %72 = vector.broadcast %70 : vector<1x1x256xf32> to vector<2x1x256xf32>
    %73 = arith.subf %72, %71 : vector<2x1x256xf32>
    %74 = vector.broadcast %69 : vector<2x1x256xf32> to vector<2x8x256xf32>
    %75 = arith.mulf %50, %74 : vector<2x8x256xf32>
    %76 = vector.broadcast %73 : vector<2x1x256xf32> to vector<2x8x256xf32>
    %77 = arith.addf %75, %76 : vector<2x8x256xf32>
    %78 = vector.shape_cast %77 : vector<2x8x256xf32> to vector<16x256xf32>
    %79 = vector.extract_strided_slice %78 {offsets = [0, 0], sizes = [16, 128], strides = [1, 1]} : vector<16x256xf32> to vector<16x128xf32>
    %80 = vector.extract_strided_slice %78 {offsets = [0, 128], sizes = [16, 128], strides = [1, 1]} : vector<16x256xf32> to vector<16x128xf32>
    %81 = arith.negf %80 : vector<16x128xf32>
    %82 = math.exp %81 : vector<16x128xf32>
    %cst_26 = arith.constant 1.000000e+00 : f32
    %83 = vector.broadcast %cst_26 : f32 to vector<16x128xf32>
    %84 = arith.addf %83, %82 : vector<16x128xf32>
    %85 = arith.divf %83, %84 : vector<16x128xf32>
    %86 = arith.mulf %79, %85 : vector<16x128xf32>
    %87 = arith.addf %43, %86 : vector<16x128xf32>
    %cst_27 = arith.constant 0.707106769 : f32
    %88 = vector.broadcast %cst_27 : f32 to vector<16x128xf32>
    %89 = arith.mulf %87, %88 : vector<16x128xf32>
    %c0_28 = arith.constant 0 : index
    %c0_29 = arith.constant 0 : index
    %90 = vector.load %arg6[%c0_28, %c0_29] : memref<16x128xf32, #tpu.memory_space<vmem>>, vector<16x128xf32>
    tpu.vector_store %arg6[%c0_28, %c0_29], %89 {strides = array<i32>} : memref<16x128xf32, #tpu.memory_space<vmem>>, vector<16x128xf32>,
    return
  }
  func.func @transform_0(%arg0: i32) -> (i32, i32) {
    %c0_i32 = arith.constant 0 : i32
    %c0_i32_0 = arith.constant 0 : i32
    return %arg0, %c0_i32 : i32, i32
  }
  func.func @transform_1(%arg0: i32) -> (i32, i32) {
    %c0_i32 = arith.constant 0 : i32
    %c0_i32_0 = arith.constant 0 : i32
    %c0_i32_1 = arith.constant 0 : i32
    return %c0_i32, %c0_i32_0 : i32, i32
  }
  func.func @transform_2(%arg0: i32) -> (i32, i32) {
    %c0_i32 = arith.constant 0 : i32
    %c0_i32_0 = arith.constant 0 : i32
    %c0_i32_1 = arith.constant 0 : i32
    return %c0_i32, %c0_i32_0 : i32, i32
  }
  func.func @transform_3(%arg0: i32) -> (i32, i32) {
    %c0_i32 = arith.constant 0 : i32
    %c0_i32_0 = arith.constant 0 : i32
    %c0_i32_1 = arith.constant 0 : i32
    return %c0_i32, %c0_i32_0 : i32, i32
  }
  func.func @transform_4(%arg0: i32) -> (i32, i32) {
    %c0_i32 = arith.constant 0 : i32
    %c0_i32_0 = arith.constant 0 : i32
    %c0_i32_1 = arith.constant 0 : i32
    return %c0_i32, %c0_i32_0 : i32, i32
  }
  func.func @transform_5(%arg0: i32) -> (i32, i32) {
    %c0_i32 = arith.constant 0 : i32
    %c0_i32_0 = arith.constant 0 : i32
    return %arg0, %c0_i32 : i32, i32
  }
}

</mosaic_0001>

<llo_original>
// kernel: tpu_custom_call.1
$region0: #{tpu_custom_call.1}
  #allocation0 [shape = 'u32[]', space=smem, size = 0x4, offset = 0x4, fixed_abs, tag = 'smem constant byte address 0x4 - core index']
  #allocation1 [shape = 'u32[144,128]{1,0:T(1,128)}', space=vmem, size = 0x12000, scoped, tag = 'internal scratch']
  %s0 = inlined_call_operand.hbm [shape: f32[16,32], index: 0, kind: input, shape index: {}]
  %s1 = inlined_call_operand.hbm [shape: f32[32,256], index: 1, kind: input, shape index: {}]
  %s2 = inlined_call_operand.hbm [shape: f32[2,256], index: 2, kind: input, shape index: {}]
  %s3 = inlined_call_operand.hbm [shape: f32[128,256], index: 3, kind: input, shape index: {}]
  %s4 = inlined_call_operand.vmem [shape: f32[2,256], index: 4, kind: input, shape index: {}]
  %s5 = inlined_call_operand.hbm [shape: f32[16,128], index: 5, kind: output, shape index: {}]
  %s6 = sld [smem:[#allocation0]]
  $region46: #{tpu_custom_call.1} parent=0
    _
  %s8 = ssub.s32 1, %s6
  %s9 = scalar_select 0, %s8, %s6
  $region1: #{tpu_custom_call.1} parent=0
    #allocation2 [shape = 'u8[8192]{0}', space=vmem, size = 0x2000, scoped, tag = 'input window, operand 0, single buffered']
    #allocation3 [shape = 's32[1]{0}', space=sflag, size = 0x4, scoped, tag = 'scoped memory for tpu_custom_call.1']
    #allocation4 [shape = 's32[1]{0}', space=sflag, size = 0x4, scoped, tag = 'scoped memory for tpu_custom_call.1']
    #allocation5 [shape = 'u8[32768]{0}', space=vmem, size = 0x8000, scoped, tag = 'input window, operand 1, single buffered']
    #allocation6 [shape = 's32[1]{0}', space=sflag, size = 0x4, scoped, tag = 'scoped memory for tpu_custom_call.1']
    #allocation7 [shape = 'u8[2048]{0}', space=vmem, size = 0x800, scoped, tag = 'input window, operand 2, single buffered']
    #allocation8 [shape = 'u8[131072]{0}', space=vmem, size = 0x20000, scoped, tag = 'input window, operand 3, single buffered']
    #allocation9 [shape = 's32[1]{0}', space=sflag, size = 0x4, scoped, tag = 'scoped memory for tpu_custom_call.1']
    #allocation10 [shape = 'u8[8192]{0}', space=vmem, size = 0x2000, scoped, tag = 'output window, operand 0, single buffered']
    %10 = vsyncpa [#allocation3], 0
    %11 = vsyncpa [#allocation6], 0
    %12 = vsyncpa [#allocation9], 0
    %13 = vsyncpa [#allocation4], 0
    // Predicated region
    $region2: #{tpu_custom_call.1} parent=1 // pred_check
      _
    $region3: #{tpu_custom_call.1} parent=1 // pred_check_branch
      %15 = sbr.rel (0) target = $region5
    $region4: #{tpu_custom_call.1} parent=1 // pred_region
      %s17 = ssub.s32 256, 256
      %18 = vsyncadd [#allocation3], %s17
      %s19 = sshll.u32 [#allocation2], 4
      %s20 = int_to_ptr.vmem [resolvable:$true] %s19
      %25 = dma.hbm_to_vmem [thread:$0]  %s0, 256, %s20, [#allocation3], 128, 128, 8
    $region5: #{tpu_custom_call.1} parent=1 // pred_fallthru
      _
    // Predicated region
    $region6: #{tpu_custom_call.1} parent=1 // pred_check
      _
    $region7: #{tpu_custom_call.1} parent=1 // pred_check_branch
      %27 = sbr.rel (0) target = $region9
    $region8: #{tpu_custom_call.1} parent=1 // pred_region
      %s29 = ssub.s32 1024, 1024
      %30 = vsyncadd [#allocation6], %s29
      %s31 = sshll.u32 [#allocation5], 4
      %s32 = int_to_ptr.vmem [resolvable:$true] %s31
      %37 = dma.hbm_to_vmem [thread:$0]  %s1, 1024, %s32, [#allocation6], 256, 256, 16
    $region9: #{tpu_custom_call.1} parent=1 // pred_fallthru
      _
    // Predicated region
    $region10: #{tpu_custom_call.1} parent=1 // pred_check
      _
    $region11: #{tpu_custom_call.1} parent=1 // pred_check_branch
      %39 = sbr.rel (0) target = $region13
    $region12: #{tpu_custom_call.1} parent=1 // pred_region
      %s41 = ssub.s32 64, 64
      %42 = vsyncadd [#allocation6], %s41
      %s44 = sshll.u32 [#allocation7], 4
      %s45 = int_to_ptr.vmem [resolvable:$true] %s44
      %47 = dma.hbm_to_vmem [thread:$0]  %s2, 64, %s45, [#allocation6]
    $region13: #{tpu_custom_call.1} parent=1 // pred_fallthru
      _
    // Predicated region
    $region14: #{tpu_custom_call.1} parent=1 // pred_check
      _
    $region15: #{tpu_custom_call.1} parent=1 // pred_check_branch
      %49 = sbr.rel (0) target = $region17
    $region16: #{tpu_custom_call.1} parent=1 // pred_region
      %s51 = ssub.s32 4096, 4096
      %52 = vsyncadd [#allocation9], %s51
      %s53 = sshll.u32 [#allocation8], 4
      %s54 = int_to_ptr.vmem [resolvable:$true] %s53
      %59 = dma.hbm_to_vmem [thread:$0]  %s3, 4096, %s54, [#allocation9], 256, 256, 16
    $region17: #{tpu_custom_call.1} parent=1 // pred_fallthru
      _
    // Predicated region
    $region18: #{tpu_custom_call.1} parent=1 // pred_check
      _
    $region19: #{tpu_custom_call.1} parent=1 // pred_check_branch
      %61 = sbr.rel (0) target = $region21
    $region20: #{tpu_custom_call.1} parent=1 // pred_region
      _
    $region21: #{tpu_custom_call.1} parent=1 // pred_fallthru
      _
    // Predicated region
    $region22: #{tpu_custom_call.1} parent=1 // pred_check
      _
    $region23: #{tpu_custom_call.1} parent=1 // pred_check_branch
      %63 = sbr.rel (0) target = $region25
    $region24: #{tpu_custom_call.1} parent=1 // pred_region
      %64 = dma.done [#allocation3], 256
    $region25: #{tpu_custom_call.1} parent=1 // pred_fallthru
      _
    // Predicated region
    $region26: #{tpu_custom_call.1} parent=1 // pred_check
      _
    $region27: #{tpu_custom_call.1} parent=1 // pred_check_branch
      %66 = sbr.rel (0) target = $region29
    $region28: #{tpu_custom_call.1} parent=1 // pred_region
      %67 = dma.done [#allocation6], 1024
    $region29: #{tpu_custom_call.1} parent=1 // pred_fallthru
      _
    // Predicated region
    $region30: #{tpu_custom_call.1} parent=1 // pred_check
      _
    $region31: #{tpu_custom_call.1} parent=1 // pred_check_branch
      %69 = sbr.rel (0) target = $region33
    $region32: #{tpu_custom_call.1} parent=1 // pred_region
      %70 = dma.done [#allocation6], 64
    $region33: #{tpu_custom_call.1} parent=1 // pred_fallthru
      _
    // Predicated region
    $region34: #{tpu_custom_call.1} parent=1 // pred_check
      _
    $region35: #{tpu_custom_call.1} parent=1 // pred_check_branch
      %72 = sbr.rel (0) target = $region37
    $region36: #{tpu_custom_call.1} parent=1 // pred_region
      %73 = dma.done [#allocation9], 4096
    $region37: #{tpu_custom_call.1} parent=1 // pred_fallthru
      _
    %v74 = vld [vmem:[#allocation2] sm:$0xff]
    %v75 = vld [vmem:[#allocation2 + $0x8] sm:$0xff]
    %v76 = vld [vmem:[#allocation5] sm:$0xff]
    %v77 = vld [vmem:[#allocation5 + $0x8] sm:$0xff]
    %v78 = vld [vmem:[#allocation5 + $0x10] sm:$0xff]
    %v79 = vld [vmem:[#allocation5 + $0x18] sm:$0xff]
    %v80 = vld [vmem:[#allocation5 + $0x20] sm:$0xff]
    %v81 = vld [vmem:[#allocation5 + $0x28] sm:$0xff]
    %v82 = vld [vmem:[#allocation5 + $0x30] sm:$0xff]
    %v83 = vld [vmem:[#allocation5 + $0x38] sm:$0xff]
    %vm84 = vcmask 261120
    %v86 = vsel %vm84, %v74, 0
    %v89 = vsel %vm84, %v75, 0
    %91 = vmatprep.subr.mxu0 0.0
    %92 = vmatpush1.msra.mxu0 0.0
    %93 = vmatprep.subr.mxu0 0.0
    %94 = vmatpush1.msra.mxu0 0.0
    %95 = vmatprep.subr.mxu0 0.0
    %96 = vmatpush1.msra.mxu0 0.0
    %97 = vmatprep.subr.mxu0 0.0
    %98 = vmatpush1.msra.mxu0 0.0
    %99 = vmatprep.subr.mxu0 0.0
    %100 = vmatpush1.msra.mxu0 0.0
    %101 = vmatprep.subr.mxu0 0.0
    %102 = vmatpush1.msra.mxu0 0.0
    %103 = vmatprep.subr.mxu0 0.0
    %104 = vmatpush1.msra.mxu0 0.0
    %105 = vmatprep.subr.mxu0 0.0
    %106 = vmatpush1.msra.mxu0 0.0
    %107 = vmatprep.subr.mxu0 0.0
    %108 = vmatpush1.msra.mxu0 0.0
    %109 = vmatprep.subr.mxu0 0.0
    %110 = vmatpush1.msra.mxu0 0.0
    %111 = vmatprep.subr.mxu0 0.0
    %112 = vmatpush1.msra.mxu0 0.0
    %113 = vmatprep.subr.mxu0 0.0
    %114 = vmatpush1.msra.mxu0 0.0
    %115 = vmatprep.subr.mxu0 %v83
    %116 = vmatpush1.msra.mxu0 %v82
    %117 = vmatprep.subr.mxu0 %v81
    %118 = vmatpush1.msra.mxu0 %v80
    %119 = vmatprep.subr.mxu0 %v79
    %120 = vmatpush1.msra.mxu0 %v78
    %121 = vmatprep.subr.mxu0 %v77
    %122 = vmatpush1.msra.mxu0 %v76
    %123 = vmatprep.subr.mxu0 0.0
    %124 = vmatpush2.msra.mxu0 0.0
    %125 = vmatprep.subr.mxu0 0.0
    %126 = vmatpush2.msra.mxu0 0.0
    %127 = vmatprep.subr.mxu0 0.0
    %128 = vmatpush2.msra.mxu0 0.0
    %129 = vmatprep.subr.mxu0 0.0
    %130 = vmatpush2.msra.mxu0 0.0
    %131 = vmatprep.subr.mxu0 0.0
    %132 = vmatpush2.msra.mxu0 0.0
    %133 = vmatprep.subr.mxu0 0.0
    %134 = vmatpush2.msra.mxu0 0.0
    %135 = vmatprep.subr.mxu0 0.0
    %136 = vmatpush2.msra.mxu0 0.0
    %137 = vmatprep.subr.mxu0 0.0
    %138 = vmatpush2.msra.mxu0 0.0
    %139 = vmatprep.subr.mxu0 0.0
    %140 = vmatpush2.msra.mxu0 0.0
    %141 = vmatprep.subr.mxu0 0.0
    %142 = vmatpush2.msra.mxu0 0.0
    %143 = vmatprep.subr.mxu0 0.0
    %144 = vmatpush2.msra.mxu0 0.0
    %145 = vmatprep.subr.mxu0 0.0
    %146 = vmatpush2.msra.mxu0 0.0
    %147 = vmatprep.subr.mxu0 0.0
    %148 = vmatpush2.msra.mxu0 0.0
    %149 = vmatprep.subr.mxu0 0.0
    %150 = vmatpush2.msra.mxu0 0.0
    %151 = vmatprep.subr.mxu0 0.0
    %152 = vmatpush2.msra.mxu0 0.0
    %153 = vmatprep.subr.mxu0 0.0
    %154 = vmatpush2.msra.mxu0 0.0
    %155 = vmatprep.mubr.f32.mxu0 0.0
    %156 = vmatmul.mubr.f32.gmra.mxu0 %v86
    %v157 = vpop.f32.mrf.mxu0
    %v158 = vadd.f32 0.0, %v157
    %v159 = vpop.f32.mrf.mxu0
    %v160 = vadd.f32 0.0, %v159
    %161 = vmatprep.mubr.f32.mxu0 0.0
    %162 = vmatmul.mubr.f32.gmra.mxu0 %v89
    %v163 = vpop.f32.mrf.mxu0
    %v164 = vadd.f32 0.0, %v163
    %v165 = vpop.f32.mrf.mxu0
    %v166 = vadd.f32 0.0, %v165
    %167 = vdwg.mxu0
    %v168 = vld [vmem:[#allocation7] ss:$2 sm:$0x3]
    %s169 = scalar_lea.vmem [#allocation7], 1
    %v170 = vld [vmem:[%s169] ss:$2 sm:$0x3]
    %v171 = vrot.slane %v158, 4
    %v172 = vadd.f32 %v158, %v171
    %v173 = vrot.slane %v172, 2
    %v174 = vadd.f32 %v172, %v173
    %v175 = vrot.slane %v174, 1
    %v176 = vadd.f32 %v174, %v175
    %v177 = vrot.slane %v160, 4
    %v178 = vadd.f32 %v160, %v177
    %v179 = vrot.slane %v178, 2
    %v180 = vadd.f32 %v178, %v179
    %v181 = vrot.slane %v180, 1
    %v182 = vadd.f32 %v180, %v181
    %v183 = vrot.slane %v164, 4
    %v184 = vadd.f32 %v164, %v183
    %v185 = vrot.slane %v184, 2
    %v186 = vadd.f32 %v184, %v185
    %v187 = vrot.slane %v186, 1
    %v188 = vadd.f32 %v186, %v187
    %v189 = vrot.slane %v166, 4
    %v190 = vadd.f32 %v166, %v189
    %v191 = vrot.slane %v190, 2
    %v192 = vadd.f32 %v190, %v191
    %v193 = vrot.slane %v192, 1
    %v194 = vadd.f32 %v192, %v193
    %v195 = vrcp.pop 8.0
    %v196 = vmul.f32 %v176, %v195
    %v197 = vmul.f32 %v182, %v195
    %v198 = vmul.f32 %v188, %v195
    %v199 = vmul.f32 %v194, %v195
    %v200 = vmul.f32 %v158, %v158
    %v201 = vmul.f32 %v160, %v160
    %v202 = vmul.f32 %v164, %v164
    %v203 = vmul.f32 %v166, %v166
    %v204 = vrot.slane %v200, 4
    %v205 = vadd.f32 %v200, %v204
    %v206 = vrot.slane %v205, 2
    %v207 = vadd.f32 %v205, %v206
    %v208 = vrot.slane %v207, 1
    %v209 = vadd.f32 %v207, %v208
    %v210 = vrot.slane %v201, 4
    %v211 = vadd.f32 %v201, %v210
    %v212 = vrot.slane %v211, 2
    %v213 = vadd.f32 %v211, %v212
    %v214 = vrot.slane %v213, 1
    %v215 = vadd.f32 %v213, %v214
    %v216 = vrot.slane %v202, 4
    %v217 = vadd.f32 %v202, %v216
    %v218 = vrot.slane %v217, 2
    %v219 = vadd.f32 %v217, %v218
    %v220 = vrot.slane %v219, 1
    %v221 = vadd.f32 %v219, %v220
    %v222 = vrot.slane %v203, 4
    %v223 = vadd.f32 %v203, %v222
    %v224 = vrot.slane %v223, 2
    %v225 = vadd.f32 %v223, %v224
    %v226 = vrot.slane %v225, 1
    %v227 = vadd.f32 %v225, %v226
    %v228 = vmul.f32 %v209, %v195
    %v229 = vmul.f32 %v215, %v195
    %v230 = vmul.f32 %v221, %v195
    %v231 = vmul.f32 %v227, %v195
    %v232 = vmul.f32 %v196, %v196
    %v233 = vmul.f32 %v197, %v197
    %v234 = vmul.f32 %v198, %v198
    %v235 = vmul.f32 %v199, %v199
    %v236 = vsub.f32 %v228, %v232
    %v237 = vsub.f32 %v229, %v233
    %v238 = vsub.f32 %v230, %v234
    %v239 = vsub.f32 %v231, %v235
    %v240 = vmax.f32 %v236, 0.0
    %v241 = vmax.f32 %v237, 0.0
    %v242 = vmax.f32 %v238, 0.0
    %v243 = vmax.f32 %v239, 0.0
    %v244 = vadd.f32 %v240, 1e-05
    %v245 = vadd.f32 %v241, 1e-05
    %v246 = vadd.f32 %v242, 1e-05
    %v247 = vadd.f32 %v243, 1e-05
    %v248 = vrsqrt.pop %v244
    %v249 = vrsqrt.pop %v245
    %v250 = vrsqrt.pop %v246
    %v251 = vrsqrt.pop %v247
    %v256 = vcombine.low %v248, %v249
    %v258 = vunpack.c.l.s4 1966171168
    %v259 = vunpack.c.0.s8 %v258
    %v260 = vlaneseq
    %v261 = vshrl.u32 %v260, 7
    %v262 = vsub.s32 %v259, %v261
    %v263 = vrot.slane %v256, %v262
    %v265 = vunpack.c.l.s4 1966171168
    %v266 = vunpack.c.0.s8 %v265
    %v267 = vlaneseq
    %v268 = vshrl.u32 %v267, 7
    %v269 = vsub.s32 %v266, %v268
    %v270 = vrot.slane %v263, %v269
    %v271 = vcombine.low %v250, %v251
    %v273 = vunpack.c.l.s4 1966171168
    %v274 = vunpack.c.0.s8 %v273
    %v275 = vlaneseq
    %v276 = vshrl.u32 %v275, 7
    %v277 = vsub.s32 %v274, %v276
    %v278 = vrot.slane %v271, %v277
    %v280 = vunpack.c.l.s4 1966171168
    %v281 = vunpack.c.0.s8 %v280
    %v282 = vlaneseq
    %v283 = vshrl.u32 %v282, 7
    %v284 = vsub.s32 %v281, %v283
    %v285 = vrot.slane %v278, %v284
    %v288 = vmul.f32 %v168, %v270
    %v289 = vmul.f32 %v168, %v285
    %v292 = vlaneseq
    %v293 = vshrl.u32 %v292, 7
    %v294 = vsub.s32 0, %v293
    %v295 = vrot.slane %v288, %v294
    %v296 = vlaneseq
    %v297 = vshrl.u32 %v296, 7
    %v298 = vsub.s32 1, %v297
    %v299 = vrot.slane %v288, %v298
    %v300 = vlaneseq
    %v301 = vshrl.u32 %v300, 7
    %v302 = vsub.s32 0, %v301
    %v303 = vrot.slane %v289, %v302
    %v304 = vlaneseq
    %v305 = vshrl.u32 %v304, 7
    %v306 = vsub.s32 1, %v305
    %v307 = vrot.slane %v289, %v306
    %v312 = vmul.f32 %v196, %v295
    %v313 = vmul.f32 %v197, %v299
    %v314 = vmul.f32 %v198, %v303
    %v315 = vmul.f32 %v199, %v307
    %v320 = vcombine.low %v312, %v313
    %v322 = vunpack.c.l.s4 1966171168
    %v323 = vunpack.c.0.s8 %v322
    %v324 = vlaneseq
    %v325 = vshrl.u32 %v324, 7
    %v326 = vsub.s32 %v323, %v325
    %v327 = vrot.slane %v320, %v326
    %v329 = vunpack.c.l.s4 1966171168
    %v330 = vunpack.c.0.s8 %v329
    %v331 = vlaneseq
    %v332 = vshrl.u32 %v331, 7
    %v333 = vsub.s32 %v330, %v332
    %v334 = vrot.slane %v327, %v333
    %v335 = vcombine.low %v314, %v315
    %v337 = vunpack.c.l.s4 1966171168
    %v338 = vunpack.c.0.s8 %v337
    %v339 = vlaneseq
    %v340 = vshrl.u32 %v339, 7
    %v341 = vsub.s32 %v338, %v340
    %v342 = vrot.slane %v335, %v341
    %v344 = vunpack.c.l.s4 1966171168
    %v345 = vunpack.c.0.s8 %v344
    %v346 = vlaneseq
    %v347 = vshrl.u32 %v346, 7
    %v348 = vsub.s32 %v345, %v347
    %v349 = vrot.slane %v342, %v348
    %v352 = vsub.f32 %v170, %v334
    %v353 = vsub.f32 %v170, %v349
    %v354 = vmul.f32 %v158, %v295
    %v355 = vmul.f32 %v160, %v299
    %v356 = vmul.f32 %v164, %v303
    %v357 = vmul.f32 %v166, %v307
    %v360 = vlaneseq
    %v361 = vshrl.u32 %v360, 7
    %v362 = vsub.s32 0, %v361
    %v363 = vrot.slane %v352, %v362
    %v364 = vlaneseq
    %v365 = vshrl.u32 %v364, 7
    %v366 = vsub.s32 1, %v365
    %v367 = vrot.slane %v352, %v366
    %v368 = vlaneseq
    %v369 = vshrl.u32 %v368, 7
    %v370 = vsub.s32 0, %v369
    %v371 = vrot.slane %v353, %v370
    %v372 = vlaneseq
    %v373 = vshrl.u32 %v372, 7
    %v374 = vsub.s32 1, %v373
    %v375 = vrot.slane %v353, %v374
    %v380 = vadd.f32 %v354, %v363
    %v381 = vadd.f32 %v355, %v367
    %v382 = vadd.f32 %v356, %v371
    %v383 = vadd.f32 %v357, %v375
    %v384 = vxor.u32 %v381, 2147483648
    %v385 = vxor.u32 %v383, 2147483648
    %v386 = vmul.f32 %v384, 1.442695
    %v387 = vpow.pop %v386
    %v388 = vmul.f32 %v385, 1.442695
    %v389 = vpow.pop %v388
    %v390 = vadd.f32 %v387, 1.0
    %v391 = vadd.f32 %v389, 1.0
    %v392 = vrcp.pop %v390
    %v393 = vmul.f32 1.0, %v392
    %v394 = vrcp.pop %v391
    %v395 = vmul.f32 1.0, %v394
    %v396 = vmul.f32 %v380, %v393
    %v397 = vmul.f32 %v382, %v395
    %v398 = vld [vmem:[#allocation8] sm:$0xff]
    %v399 = vld [vmem:[#allocation8 + $0x8] sm:$0xff]
    %v400 = vld [vmem:[#allocation8 + $0x10] sm:$0xff]
    %v401 = vld [vmem:[#allocation8 + $0x18] sm:$0xff]
    %v402 = vld [vmem:[#allocation8 + $0x20] sm:$0xff]
    %v403 = vld [vmem:[#allocation8 + $0x28] sm:$0xff]
    %v404 = vld [vmem:[#allocation8 + $0x30] sm:$0xff]
    %v405 = vld [vmem:[#allocation8 + $0x38] sm:$0xff]
    %v406 = vld [vmem:[#allocation8 + $0x40] sm:$0xff]
    %v407 = vld [vmem:[#allocation8 + $0x48] sm:$0xff]
    %v408 = vld [vmem:[#allocation8 + $0x50] sm:$0xff]
    %v409 = vld [vmem:[#allocation8 + $0x58] sm:$0xff]
    %v410 = vld [vmem:[#allocation8 + $0x60] sm:$0xff]
    %v411 = vld [vmem:[#allocation8 + $0x68] sm:$0xff]
    %v412 = vld [vmem:[#allocation8 + $0x70] sm:$0xff]
    %v413 = vld [vmem:[#allocation8 + $0x78] sm:$0xff]
    %v414 = vld [vmem:[#allocation8 + $0x80] sm:$0xff]
    %v415 = vld [vmem:[#allocation8 + $0x88] sm:$0xff]
    %v416 = vld [vmem:[#allocation8 + $0x90] sm:$0xff]
    %v417 = vld [vmem:[#allocation8 + $0x98] sm:$0xff]
    %v418 = vld [vmem:[#allocation8 + $0xa0] sm:$0xff]
    %v419 = vld [vmem:[#allocation8 + $0xa8] sm:$0xff]
    %v420 = vld [vmem:[#allocation8 + $0xb0] sm:$0xff]
    %v421 = vld [vmem:[#allocation8 + $0xb8] sm:$0xff]
    %v422 = vld [vmem:[#allocation8 + $0xc0] sm:$0xff]
    %v423 = vld [vmem:[#allocation8 + $0xc8] sm:$0xff]
    %v424 = vld [vmem:[#allocation8 + $0xd0] sm:$0xff]
    %v425 = vld [vmem:[#allocation8 + $0xd8] sm:$0xff]
    %v426 = vld [vmem:[#allocation8 + $0xe0] sm:$0xff]
    %v427 = vld [vmem:[#allocation8 + $0xe8] sm:$0xff]
    %v428 = vld [vmem:[#allocation8 + $0xf0] sm:$0xff]
    %v429 = vld [vmem:[#allocation8 + $0xf8] sm:$0xff]
    %430 = vmatprep.subr.mxu0 %v429
    %431 = vmatpush1.msra.mxu0 %v428
    %432 = vmatprep.subr.mxu0 %v427
    %433 = vmatpush1.msra.mxu0 %v426
    %434 = vmatprep.subr.mxu0 %v425
    %435 = vmatpush1.msra.mxu0 %v424
    %436 = vmatprep.subr.mxu0 %v423
    %437 = vmatpush1.msra.mxu0 %v422
    %438 = vmatprep.subr.mxu0 %v421
    %439 = vmatpush1.msra.mxu0 %v420
    %440 = vmatprep.subr.mxu0 %v419
    %441 = vmatpush1.msra.mxu0 %v418
    %442 = vmatprep.subr.mxu0 %v417
    %443 = vmatpush1.msra.mxu0 %v416
    %444 = vmatprep.subr.mxu0 %v415
    %445 = vmatpush1.msra.mxu0 %v414
    %446 = vmatprep.subr.mxu0 %v413
    %447 = vmatpush1.msra.mxu0 %v412
    %448 = vmatprep.subr.mxu0 %v411
    %449 = vmatpush1.msra.mxu0 %v410
    %450 = vmatprep.subr.mxu0 %v409
    %451 = vmatpush1.msra.mxu0 %v408
    %452 = vmatprep.subr.mxu0 %v407
    %453 = vmatpush1.msra.mxu0 %v406
    %454 = vmatprep.subr.mxu0 %v405
    %455 = vmatpush1.msra.mxu0 %v404
    %456 = vmatprep.subr.mxu0 %v403
    %457 = vmatpush1.msra.mxu0 %v402
    %458 = vmatprep.subr.mxu0 %v401
    %459 = vmatpush1.msra.mxu0 %v400
    %460 = vmatprep.subr.mxu0 %v399
    %461 = vmatpush1.msra.mxu0 %v398
    %462 = vmatprep.subr.mxu0 0.0
    %463 = vmatpush2.msra.mxu0 0.0
    %464 = vmatprep.subr.mxu0 0.0
    %465 = vmatpush2.msra.mxu0 0.0
    %466 = vmatprep.subr.mxu0 0.0
    %467 = vmatpush2.msra.mxu0 0.0
    %468 = vmatprep.subr.mxu0 0.0
    %469 = vmatpush2.msra.mxu0 0.0
    %470 = vmatprep.subr.mxu0 0.0
    %471 = vmatpush2.msra.mxu0 0.0
    %472 = vmatprep.subr.mxu0 0.0
    %473 = vmatpush2.msra.mxu0 0.0
    %474 = vmatprep.subr.mxu0 0.0
    %475 = vmatpush2.msra.mxu0 0.0
    %476 = vmatprep.subr.mxu0 0.0
    %477 = vmatpush2.msra.mxu0 0.0
    %478 = vmatprep.subr.mxu0 0.0
    %479 = vmatpush2.msra.mxu0 0.0
    %480 = vmatprep.subr.mxu0 0.0
    %481 = vmatpush2.msra.mxu0 0.0
    %482 = vmatprep.subr.mxu0 0.0
    %483 = vmatpush2.msra.mxu0 0.0
    %484 = vmatprep.subr.mxu0 0.0
    %485 = vmatpush2.msra.mxu0 0.0
    %486 = vmatprep.subr.mxu0 0.0
    %487 = vmatpush2.msra.mxu0 0.0
    %488 = vmatprep.subr.mxu0 0.0
    %489 = vmatpush2.msra.mxu0 0.0
    %490 = vmatprep.subr.mxu0 0.0
    %491 = vmatpush2.msra.mxu0 0.0
    %492 = vmatprep.subr.mxu0 0.0
    %493 = vmatpush2.msra.mxu0 0.0
    %494 = vmatprep.mubr.f32.mxu0 0.0
    %495 = vmatmul.mubr.f32.gmra.mxu0 %v396
    %v496 = vpop.f32.mrf.mxu0
    %v497 = vadd.f32 0.0, %v496
    %v498 = vpop.f32.mrf.mxu0
    %v499 = vadd.f32 0.0, %v498
    %500 = vmatprep.mubr.f32.mxu0 0.0
    %501 = vmatmul.mubr.f32.gmra.mxu0 %v397
    %v502 = vpop.f32.mrf.mxu0
    %v503 = vadd.f32 0.0, %v502
    %v504 = vpop.f32.mrf.mxu0
    %v505 = vadd.f32 0.0, %v504
    %506 = vdwg.mxu0
    %v507 = vld [vmem:[%s4] ss:$2 sm:$0x3]
    %s508 = scalar_lea.vmem %s4, 1
    %v509 = vld [vmem:[%s508] ss:$2 sm:$0x3]
    %v510 = vrot.slane %v497, 4
    %v511 = vadd.f32 %v497, %v510
    %v512 = vrot.slane %v511, 2
    %v513 = vadd.f32 %v511, %v512
    %v514 = vrot.slane %v513, 1
    %v515 = vadd.f32 %v513, %v514
    %v516 = vrot.slane %v499, 4
    %v517 = vadd.f32 %v499, %v516
    %v518 = vrot.slane %v517, 2
    %v519 = vadd.f32 %v517, %v518
    %v520 = vrot.slane %v519, 1
    %v521 = vadd.f32 %v519, %v520
    %v522 = vrot.slane %v503, 4
    %v523 = vadd.f32 %v503, %v522
    %v524 = vrot.slane %v523, 2
    %v525 = vadd.f32 %v523, %v524
    %v526 = vrot.slane %v525, 1
    %v527 = vadd.f32 %v525, %v526
    %v528 = vrot.slane %v505, 4
    %v529 = vadd.f32 %v505, %v528
    %v530 = vrot.slane %v529, 2
    %v531 = vadd.f32 %v529, %v530
    %v532 = vrot.slane %v531, 1
    %v533 = vadd.f32 %v531, %v532
    %v534 = vmul.f32 %v515, %v195
    %v535 = vmul.f32 %v521, %v195
    %v536 = vmul.f32 %v527, %v195
    %v537 = vmul.f32 %v533, %v195
    %v538 = vmul.f32 %v497, %v497
    %v539 = vmul.f32 %v499, %v499
    %v540 = vmul.f32 %v503, %v503
    %v541 = vmul.f32 %v505, %v505
    %v542 = vrot.slane %v538, 4
    %v543 = vadd.f32 %v538, %v542
    %v544 = vrot.slane %v543, 2
    %v545 = vadd.f32 %v543, %v544
    %v546 = vrot.slane %v545, 1
    %v547 = vadd.f32 %v545, %v546
    %v548 = vrot.slane %v539, 4
    %v549 = vadd.f32 %v539, %v548
    %v550 = vrot.slane %v549, 2
    %v551 = vadd.f32 %v549, %v550
    %v552 = vrot.slane %v551, 1
    %v553 = vadd.f32 %v551, %v552
    %v554 = vrot.slane %v540, 4
    %v555 = vadd.f32 %v540, %v554
    %v556 = vrot.slane %v555, 2
    %v557 = vadd.f32 %v555, %v556
    %v558 = vrot.slane %v557, 1
    %v559 = vadd.f32 %v557, %v558
    %v560 = vrot.slane %v541, 4
    %v561 = vadd.f32 %v541, %v560
    %v562 = vrot.slane %v561, 2
    %v563 = vadd.f32 %v561, %v562
    %v564 = vrot.slane %v563, 1
    %v565 = vadd.f32 %v563, %v564
    %v566 = vmul.f32 %v547, %v195
    %v567 = vmul.f32 %v553, %v195
    %v568 = vmul.f32 %v559, %v195
    %v569 = vmul.f32 %v565, %v195
    %v570 = vmul.f32 %v534, %v534
    %v571 = vmul.f32 %v535, %v535
    %v572 = vmul.f32 %v536, %v536
    %v573 = vmul.f32 %v537, %v537
    %v574 = vsub.f32 %v566, %v570
    %v575 = vsub.f32 %v567, %v571
    %v576 = vsub.f32 %v568, %v572
    %v577 = vsub.f32 %v569, %v573
    %v578 = vmax.f32 %v574, 0.0
    %v579 = vmax.f32 %v575, 0.0
    %v580 = vmax.f32 %v576, 0.0
    %v581 = vmax.f32 %v577, 0.0
    %v582 = vadd.f32 %v578, 1e-05
    %v583 = vadd.f32 %v579, 1e-05
    %v584 = vadd.f32 %v580, 1e-05
    %v585 = vadd.f32 %v581, 1e-05
    %v586 = vrsqrt.pop %v582
    %v587 = vrsqrt.pop %v583
    %v588 = vrsqrt.pop %v584
    %v589 = vrsqrt.pop %v585
    %v594 = vcombine.low %v586, %v587
    %v596 = vunpack.c.l.s4 1966171168
    %v597 = vunpack.c.0.s8 %v596
    %v598 = vlaneseq
    %v599 = vshrl.u32 %v598, 7
    %v600 = vsub.s32 %v597, %v599
    %v601 = vrot.slane %v594, %v600
    %v603 = vunpack.c.l.s4 1966171168
    %v604 = vunpack.c.0.s8 %v603
    %v605 = vlaneseq
    %v606 = vshrl.u32 %v605, 7
    %v607 = vsub.s32 %v604, %v606
    %v608 = vrot.slane %v601, %v607
    %v609 = vcombine.low %v588, %v589
    %v611 = vunpack.c.l.s4 1966171168
    %v612 = vunpack.c.0.s8 %v611
    %v613 = vlaneseq
    %v614 = vshrl.u32 %v613, 7
    %v615 = vsub.s32 %v612, %v614
    %v616 = vrot.slane %v609, %v615
    %v618 = vunpack.c.l.s4 1966171168
    %v619 = vunpack.c.0.s8 %v618
    %v620 = vlaneseq
    %v621 = vshrl.u32 %v620, 7
    %v622 = vsub.s32 %v619, %v621
    %v623 = vrot.slane %v616, %v622
    %v626 = vmul.f32 %v507, %v608
    %v627 = vmul.f32 %v507, %v623
    %v630 = vlaneseq
    %v631 = vshrl.u32 %v630, 7
    %v632 = vsub.s32 0, %v631
    %v633 = vrot.slane %v626, %v632
    %v634 = vlaneseq
    %v635 = vshrl.u32 %v634, 7
    %v636 = vsub.s32 1, %v635
    %v637 = vrot.slane %v626, %v636
    %v638 = vlaneseq
    %v639 = vshrl.u32 %v638, 7
    %v640 = vsub.s32 0, %v639
    %v641 = vrot.slane %v627, %v640
    %v642 = vlaneseq
    %v643 = vshrl.u32 %v642, 7
    %v644 = vsub.s32 1, %v643
    %v645 = vrot.slane %v627, %v644
    %v650 = vmul.f32 %v534, %v633
    %v651 = vmul.f32 %v535, %v637
    %v652 = vmul.f32 %v536, %v641
    %v653 = vmul.f32 %v537, %v645
    %v658 = vcombine.low %v650, %v651
    %v660 = vunpack.c.l.s4 1966171168
    %v661 = vunpack.c.0.s8 %v660
    %v662 = vlaneseq
    %v663 = vshrl.u32 %v662, 7
    %v664 = vsub.s32 %v661, %v663
    %v665 = vrot.slane %v658, %v664
    %v667 = vunpack.c.l.s4 1966171168
    %v668 = vunpack.c.0.s8 %v667
    %v669 = vlaneseq
    %v670 = vshrl.u32 %v669, 7
    %v671 = vsub.s32 %v668, %v670
    %v672 = vrot.slane %v665, %v671
    %v673 = vcombine.low %v652, %v653
    %v675 = vunpack.c.l.s4 1966171168
    %v676 = vunpack.c.0.s8 %v675
    %v677 = vlaneseq
    %v678 = vshrl.u32 %v677, 7
    %v679 = vsub.s32 %v676, %v678
    %v680 = vrot.slane %v673, %v679
    %v682 = vunpack.c.l.s4 1966171168
    %v683 = vunpack.c.0.s8 %v682
    %v684 = vlaneseq
    %v685 = vshrl.u32 %v684, 7
    %v686 = vsub.s32 %v683, %v685
    %v687 = vrot.slane %v680, %v686
    %v690 = vsub.f32 %v509, %v672
    %v691 = vsub.f32 %v509, %v687
    %v692 = vmul.f32 %v497, %v633
    %v693 = vmul.f32 %v499, %v637
    %v694 = vmul.f32 %v503, %v641
    %v695 = vmul.f32 %v505, %v645
    %v698 = vlaneseq
    %v699 = vshrl.u32 %v698, 7
    %v700 = vsub.s32 0, %v699
    %v701 = vrot.slane %v690, %v700
    %v702 = vlaneseq
    %v703 = vshrl.u32 %v702, 7
    %v704 = vsub.s32 1, %v703
    %v705 = vrot.slane %v690, %v704
    %v706 = vlaneseq
    %v707 = vshrl.u32 %v706, 7
    %v708 = vsub.s32 0, %v707
    %v709 = vrot.slane %v691, %v708
    %v710 = vlaneseq
    %v711 = vshrl.u32 %v710, 7
    %v712 = vsub.s32 1, %v711
    %v713 = vrot.slane %v691, %v712
    %v718 = vadd.f32 %v692, %v701
    %v719 = vadd.f32 %v693, %v705
    %v720 = vadd.f32 %v694, %v709
    %v721 = vadd.f32 %v695, %v713
    %v722 = vxor.u32 %v719, 2147483648
    %v723 = vxor.u32 %v721, 2147483648
    %v724 = vmul.f32 %v722, 1.442695
    %v725 = vpow.pop %v724
    %v726 = vmul.f32 %v723, 1.442695
    %v727 = vpow.pop %v726
    %v728 = vadd.f32 %v725, 1.0
    %v729 = vadd.f32 %v727, 1.0
    %v730 = vrcp.pop %v728
    %v731 = vmul.f32 1.0, %v730
    %v732 = vrcp.pop %v729
    %v733 = vmul.f32 1.0, %v732
    %v734 = vmul.f32 %v718, %v731
    %v735 = vmul.f32 %v720, %v733
    %v736 = vadd.f32 %v396, %v734
    %v737 = vadd.f32 %v397, %v735
    %v738 = vmul.f32 %v736, 0.70710677
    %v739 = vmul.f32 %v737, 0.70710677
    %740 = vst [vmem:[#allocation10] sm:$0xff] %v738
    %741 = vst [vmem:[#allocation10 + $0x8] sm:$0xff] %v739
    // Predicated region
    $region38: #{tpu_custom_call.1} parent=1 // pred_check
      _
    $region39: #{tpu_custom_call.1} parent=1 // pred_check_branch
      %743 = sbr.rel (0) target = $region41
    $region40: #{tpu_custom_call.1} parent=1 // pred_region
      %s745 = ssub.s32 256, 256
      %746 = vsyncadd [#allocation4], %s745
      %s747 = sshll.u32 [#allocation10], 4
      %s748 = int_to_ptr.vmem [resolvable:$true] %s747
      %753 = dma.vmem_to_hbm [thread:$0]  %s748, 256, %s5, [#allocation4], 128, 128, 8
    $region41: #{tpu_custom_call.1} parent=1 // pred_fallthru
      _
    // Predicated region
    $region42: #{tpu_custom_call.1} parent=1 // pred_check
      _
    $region43: #{tpu_custom_call.1} parent=1 // pred_check_branch
      %755 = sbr.rel (0) target = $region45
    $region44: #{tpu_custom_call.1} parent=1 // pred_region
      %756 = dma.done [#allocation4], 256
    $region45: #{tpu_custom_call.1} parent=1 // pred_fallthru
      _
    %757 = vsyncpa [#allocation3], 1
    %758 = vsyncpa [#allocation6], 1
    %759 = vsyncpa [#allocation9], 1
    %760 = vsyncpa [#allocation4], 1

</llo_original>
